<compile_context>
chip_gen: v6e
topology: v6e:2x2x1
jax: 0.10.0
libtpu: 0.0.40
codegen_flags: <defaults>
</compile_context>

<pallas_src>
import math

import jax
import jax.numpy as jnp
from jax.experimental import pallas as pl
from jax.experimental.pallas import tpu as pltpu

LANE = 128     # lane width (last dim of a vreg)
SUBLANE = 8    # f32 sublane count (second-to-last dim)


def _round_up(x, m):
    return (x + m - 1) // m * m


def dqn_kernel(x_ref, w1_ref, b1_ref, w2_ref, b2_ref, w3_ref, b3_ref, o_ref):
    # fc1 + ReLU: narrow f32 input cast to bf16 here (MXU operands), f32 acc.
    x = x_ref[...].astype(jnp.bfloat16)
    h1 = jnp.dot(x, w1_ref[...], preferred_element_type=jnp.float32)
    h1 = jnp.maximum(h1 + b1_ref[...], 0.0)
    # fc2 + ReLU
    h2 = jnp.dot(h1.astype(jnp.bfloat16), w2_ref[...],
                 preferred_element_type=jnp.float32)
    h2 = jnp.maximum(h2 + b2_ref[...], 0.0)
    # fc3 (no activation) -- narrow N = action_size output store
    out = jnp.dot(h2.astype(jnp.bfloat16), w3_ref[...],
                  preferred_element_type=jnp.float32)
    o_ref[...] = (out + b3_ref[...]).astype(o_ref.dtype)


def init_params(key, state_size, action_size):
    """PyTorch nn.Linear-style init U[-1/sqrt(fan_in), 1/sqrt(fan_in)].
    Weights stored pre-transposed as [in, out] (f32, unpadded); biases [out]."""
    dims = [(state_size, state_size * 8),
            (state_size * 8, state_size * 6),
            (state_size * 6, action_size)]
    params = {}
    for idx, (fan_in, fan_out) in enumerate(dims, start=1):
        key, kw, kb = jax.random.split(key, 3)
        bound = 1.0 / math.sqrt(fan_in)
        params[f"w{idx}"] = jax.random.uniform(
            kw, (fan_in, fan_out), jnp.float32, minval=-bound, maxval=bound)
        params[f"b{idx}"] = jax.random.uniform(
            kb, (fan_out,), jnp.float32, minval=-bound, maxval=bound)
    return params


def pad_params(params):
    """Zero-pad only the HIDDEN feature dims to 128-lane multiples.
    Input dim (state_size) and output dim (action_size) stay narrow so the
    activation input / output HBM streams stay small.  Padded weight entries
    and padded bias entries are ZERO (correctness invariant)."""
    S, H1 = params["w1"].shape
    H2, A = params["w3"].shape
    H1p, H2p = _round_up(H1, LANE), _round_up(H2, LANE)

    def pad_w(w, rows, cols):
        wp = jnp.zeros((rows, cols), jnp.float32)
        return wp.at[:w.shape[0], :w.shape[1]].set(w).astype(jnp.bfloat16)

    def pad_b(b, cols):
        bp = jnp.zeros((1, cols), jnp.float32)
        return bp.at[:, :b.shape[-1]].set(b.reshape(1, -1))

    return {
        "w1": pad_w(params["w1"], S, H1p),   "b1": pad_b(params["b1"], H1p),
        "w2": pad_w(params["w2"], H1p, H2p), "b2": pad_b(params["b2"], H2p),
        "w3": pad_w(params["w3"], H2p, A),   "b3": pad_b(params["b3"], A),
        "state_size": S,
        "action_size": A,
    }


def simple_dqn_forward(state, padded):
    """state: [B, state_size] f32.  padded: output of pad_params()."""
    B, S = state.shape
    A = padded["action_size"]
    w1, b1 = padded["w1"], padded["b1"]
    w2, b2 = padded["w2"], padded["b2"]
    w3, b3 = padded["w3"], padded["b3"]
    assert w1.shape[0] == S
    H1p, H2p = w1.shape[1], w3.shape[0]

    # Pad batch rows only to the sublane multiple (<= 7 dead rows).
    B8 = _round_up(B, SUBLANE)
    x = state if B8 == B else jnp.pad(state, ((0, B8 - B), (0, 0)))

    # Large batch tile (cap 1024) to amortize the ~0.35 us per-grid-step
    # overhead, but sized so large B still yields >= 2 grid steps so the
    # "parallel" batch axis can use both v7x TensorCores.
    # Working set at tb=1024 is ~3 MiB -- well under scoped-VMEM defaults on
    # v5e/v6e/v7x, so no vmem_limit_bytes override is needed.
    tb = min(1024, _round_up(max(pl.cdiv(B8, 2), SUBLANE), SUBLANE))
    grid = pl.cdiv(B8, tb)          # ragged final tile is masked by Pallas

    resident = lambda a: pl.BlockSpec(a.shape, lambda i: (0,) * a.ndim)

    flops = 2 * B8 * (S * H1p + H1p * H2p + H2p * A)
    bytes_accessed = (x.size * 4
                      + (w1.size + w2.size + w3.size) * 2
                      + (b1.size + b2.size + b3.size) * 4
                      + B8 * A * 4)

    out = pl.pallas_call(
        dqn_kernel,
        out_shape=jax.ShapeDtypeStruct((B8, A), jnp.float32),
        grid=(grid,),
        in_specs=[
            pl.BlockSpec((tb, S), lambda i: (i, 0)),   # activations: batch-tiled
            resident(w1), resident(b1),                # weights/biases: resident
            resident(w2), resident(b2),
            resident(w3), resident(b3),
        ],
        out_specs=pl.BlockSpec((tb, A), lambda i: (i, 0)),
        compiler_params=pltpu.CompilerParams(
            dimension_semantics=("parallel",)),
        cost_estimate=pl.CostEstimate(
            flops=flops, transcendentals=0, bytes_accessed=bytes_accessed),
    )(x, w1, b1, w2, b2, w3, b3)

    return out if B8 == B else out[:B]


def reference_forward(state, params):
    """Pure-JAX reference using the same bf16-operand / f32-accumulate scheme."""
    bf = lambda a: a.astype(jnp.bfloat16)
    h1 = jnp.maximum(
        jnp.dot(bf(state), bf(params["w1"]),
                preferred_element_type=jnp.float32) + params["b1"][None, :], 0.0)
    h2 = jnp.maximum(
        jnp.dot(bf(h1), bf(params["w2"]),
                preferred_element_type=jnp.float32) + params["b2"][None, :], 0.0)
    return (jnp.dot(bf(h2), bf(params["w3"]),
                    preferred_element_type=jnp.float32) + params["b3"][None, :])


if __name__ == "__main__":
    key = jax.random.PRNGKey(0)
    batch, state_size, action_size = 2, 8, 4

    key, k_state = jax.random.split(key)
    state = jax.random.normal(k_state, (batch, state_size), jnp.float32)
    params = init_params(key, state_size, action_size)
    padded = pad_params(params)

    out = simple_dqn_forward(state, padded)
    jax.block_until_ready(out)

    ref = reference_forward(state, params)
    assert out.shape == (batch, action_size)
    assert jnp.allclose(out, ref, atol=2e-3, rtol=2e-3), "mismatch vs reference"

    print("KERNEL_OK")
</pallas_src>

<mosaic_0001>
module attributes {stable_mosaic.version = 11 : i64} {
  func.func @dqn_kernel(%arg0: i32, %arg1: memref<8x8xf32, #tpu.memory_space<vmem>>, %arg2: memref<8x128xbf16, #tpu.memory_space<vmem>>, %arg3: memref<1x128xf32, #tpu.memory_space<vmem>>, %arg4: memref<128x128xbf16, #tpu.memory_space<vmem>>, %arg5: memref<1x128xf32, #tpu.memory_space<vmem>>, %arg6: memref<128x4xbf16, #tpu.memory_space<vmem>>, %arg7: memref<1x4xf32, #tpu.memory_space<vmem>>, %arg8: memref<8x4xf32, #tpu.memory_space<vmem>>) attributes {dimension_semantics = [#tpu.dimension_semantics<parallel>], iteration_bounds = array<i64: 1>, scalar_prefetch = 0 : i64, scratch_operands = 0 : i64, tpu.core_type = #tpu.core_type<tc>, window_params = [{transform_indices = @transform_0, window_bounds = array<i64: 8, 8>}, {pipeline_mode = #tpu.pipeline_mode<synchronous>, transform_indices = @transform_1, window_bounds = array<i64: 8, 128>}, {pipeline_mode = #tpu.pipeline_mode<synchronous>, transform_indices = @transform_2, window_bounds = array<i64: 1, 128>}, {pipeline_mode = #tpu.pipeline_mode<synchronous>, transform_indices = @transform_3, window_bounds = array<i64: 128, 128>}, {pipeline_mode = #tpu.pipeline_mode<synchronous>, transform_indices = @transform_4, window_bounds = array<i64: 1, 128>}, {pipeline_mode = #tpu.pipeline_mode<synchronous>, transform_indices = @transform_5, window_bounds = array<i64: 128, 4>}, {pipeline_mode = #tpu.pipeline_mode<synchronous>, transform_indices = @transform_6, window_bounds = array<i64: 1, 4>}, {transform_indices = @transform_7, window_bounds = array<i64: 8, 4>}]} {
    %c0 = arith.constant 0 : index
    %c0_0 = arith.constant 0 : index
    %0 = vector.load %arg1[%c0, %c0_0] : memref<8x8xf32, #tpu.memory_space<vmem>>, vector<8x8xf32>
    %1 = arith.truncf %0 : vector<8x8xf32> to vector<8x8xbf16>
    %c0_1 = arith.constant 0 : index
    %c0_2 = arith.constant 0 : index
    %2 = vector.load %arg2[%c0_1, %c0_2] : memref<8x128xbf16, #tpu.memory_space<vmem>>, vector<8x128xbf16>
    %cst = arith.constant dense<0.000000e+00> : vector<8x128xf32>
    %3 = tpu.matmul %1, %2, %cst {dimension_numbers = #tpu.dot_dimension_numbers<[1], [0], [0], [1], [0, 0, 1, 1], [], []>} : vector<8x8xbf16>, vector<8x128xbf16>, vector<8x128xf32> -> vector<8x128xf32>
    %c0_3 = arith.constant 0 : index
    %c0_4 = arith.constant 0 : index
    %4 = vector.load %arg3[%c0_3, %c0_4] : memref<1x128xf32, #tpu.memory_space<vmem>>, vector<1x128xf32>
    %5 = vector.broadcast %4 : vector<1x128xf32> to vector<8x128xf32>
    %6 = arith.addf %3, %5 : vector<8x128xf32>
    %cst_5 = arith.constant 0.000000e+00 : f32
    %7 = vector.broadcast %cst_5 : f32 to vector<8x128xf32>
    %8 = arith.maximumf %6, %7 : vector<8x128xf32>
    %9 = arith.truncf %8 : vector<8x128xf32> to vector<8x128xbf16>
    %c0_6 = arith.constant 0 : index
    %c0_7 = arith.constant 0 : index
    %10 = vector.load %arg4[%c0_6, %c0_7] : memref<128x128xbf16, #tpu.memory_space<vmem>>, vector<128x128xbf16>
    %cst_8 = arith.constant dense<0.000000e+00> : vector<8x128xf32>
    %11 = tpu.matmul %9, %10, %cst_8 {dimension_numbers = #tpu.dot_dimension_numbers<[1], [0], [0], [1], [0, 0, 1, 1], [], []>} : vector<8x128xbf16>, vector<128x128xbf16>, vector<8x128xf32> -> vector<8x128xf32>
    %c0_9 = arith.constant 0 : index
    %c0_10 = arith.constant 0 : index
    %12 = vector.load %arg5[%c0_9, %c0_10] : memref<1x128xf32, #tpu.memory_space<vmem>>, vector<1x128xf32>
    %13 = vector.broadcast %12 : vector<1x128xf32> to vector<8x128xf32>
    %14 = arith.addf %11, %13 : vector<8x128xf32>
    %cst_11 = arith.constant 0.000000e+00 : f32
    %15 = vector.broadcast %cst_11 : f32 to vector<8x128xf32>
    %16 = arith.maximumf %14, %15 : vector<8x128xf32>
    %17 = arith.truncf %16 : vector<8x128xf32> to vector<8x128xbf16>
    %c0_12 = arith.constant 0 : index
    %c0_13 = arith.constant 0 : index
    %18 = vector.load %arg6[%c0_12, %c0_13] : memref<128x4xbf16, #tpu.memory_space<vmem>>, vector<128x4xbf16>
    %cst_14 = arith.constant dense<0.000000e+00> : vector<8x4xf32>
    %19 = tpu.matmul %17, %18, %cst_14 {dimension_numbers = #tpu.dot_dimension_numbers<[1], [0], [0], [1], [0, 0, 1, 1], [], []>} : vector<8x128xbf16>, vector<128x4xbf16>, vector<8x4xf32> -> vector<8x4xf32>
    %c0_15 = arith.constant 0 : index
    %c0_16 = arith.constant 0 : index
    %20 = vector.load %arg7[%c0_15, %c0_16] : memref<1x4xf32, #tpu.memory_space<vmem>>, vector<1x4xf32>
    %21 = vector.broadcast %20 : vector<1x4xf32> to vector<8x4xf32>
    %22 = arith.addf %19, %21 : vector<8x4xf32>
    %c0_17 = arith.constant 0 : index
    %c0_18 = arith.constant 0 : index
    %23 = vector.load %arg8[%c0_17, %c0_18] : memref<8x4xf32, #tpu.memory_space<vmem>>, vector<8x4xf32>
    tpu.vector_store %arg8[%c0_17, %c0_18], %22 {strides = array<i32>} : memref<8x4xf32, #tpu.memory_space<vmem>>, vector<8x4xf32>,
    return
  }
  func.func @transform_0(%arg0: i32) -> (i32, i32) {
    %c0_i32 = arith.constant 0 : i32
    %c0_i32_0 = arith.constant 0 : i32
    return %arg0, %c0_i32 : i32, i32
  }
  func.func @transform_1(%arg0: i32) -> (i32, i32) {
    %c0_i32 = arith.constant 0 : i32
    %c0_i32_0 = arith.constant 0 : i32
    %c0_i32_1 = arith.constant 0 : i32
    return %c0_i32, %c0_i32_0 : i32, i32
  }
  func.func @transform_2(%arg0: i32) -> (i32, i32) {
    %c0_i32 = arith.constant 0 : i32
    %c0_i32_0 = arith.constant 0 : i32
    %c0_i32_1 = arith.constant 0 : i32
    return %c0_i32, %c0_i32_0 : i32, i32
  }
  func.func @transform_3(%arg0: i32) -> (i32, i32) {
    %c0_i32 = arith.constant 0 : i32
    %c0_i32_0 = arith.constant 0 : i32
    %c0_i32_1 = arith.constant 0 : i32
    return %c0_i32, %c0_i32_0 : i32, i32
  }
  func.func @transform_4(%arg0: i32) -> (i32, i32) {
    %c0_i32 = arith.constant 0 : i32
    %c0_i32_0 = arith.constant 0 : i32
    %c0_i32_1 = arith.constant 0 : i32
    return %c0_i32, %c0_i32_0 : i32, i32
  }
  func.func @transform_5(%arg0: i32) -> (i32, i32) {
    %c0_i32 = arith.constant 0 : i32
    %c0_i32_0 = arith.constant 0 : i32
    %c0_i32_1 = arith.constant 0 : i32
    return %c0_i32, %c0_i32_0 : i32, i32
  }
  func.func @transform_6(%arg0: i32) -> (i32, i32) {
    %c0_i32 = arith.constant 0 : i32
    %c0_i32_0 = arith.constant 0 : i32
    %c0_i32_1 = arith.constant 0 : i32
    return %c0_i32, %c0_i32_0 : i32, i32
  }
  func.func @transform_7(%arg0: i32) -> (i32, i32) {
    %c0_i32 = arith.constant 0 : i32
    %c0_i32_0 = arith.constant 0 : i32
    return %arg0, %c0_i32 : i32, i32
  }
}

</mosaic_0001>

<llo_original>
// kernel: tpu_custom_call.1
$region0: #{tpu_custom_call.1}
  #allocation0 [shape = 'u32[]', space=smem, size = 0x4, offset = 0x4, fixed_abs, tag = 'smem constant byte address 0x4 - core index']
  #allocation1 [shape = 'u32[144,128]{1,0:T(1,128)}', space=vmem, size = 0x12000, scoped, tag = 'internal scratch']
  %s0 = inlined_call_operand.hbm [shape: f32[8,8], index: 0, kind: input, shape index: {}]
  %s1 = inlined_call_operand.vmem [shape: bf16[8,128], index: 1, kind: input, shape index: {}]
  %s2 = inlined_call_operand.vmem [shape: f32[1,128], index: 2, kind: input, shape index: {}]
  %s3 = inlined_call_operand.vmem [shape: bf16[128,128], index: 3, kind: input, shape index: {}]
  %s4 = inlined_call_operand.vmem [shape: f32[1,128], index: 4, kind: input, shape index: {}]
  %s5 = inlined_call_operand.vmem [shape: bf16[128,4], index: 5, kind: input, shape index: {}]
  %s6 = inlined_call_operand.vmem [shape: f32[1,4], index: 6, kind: input, shape index: {}]
  %s7 = inlined_call_operand.vmem [shape: f32[8,4], index: 7, kind: output, shape index: {}]
  %s8 = sld [smem:[#allocation0]]
  $region42: #{tpu_custom_call.1} parent=0
    _
  %s10 = ssub.s32 1, %s8
  %s11 = scalar_select 0, %s10, %s8
  $region1: #{tpu_custom_call.1} parent=0
    #allocation2 [shape = 'u8[4096]{0}', space=vmem, size = 0x1000, scoped, tag = 'input window, operand 0, single buffered']
    #allocation3 [shape = 's32[1]{0}', space=sflag, size = 0x4, scoped, tag = 'scoped memory for tpu_custom_call.1']
    %12 = vsyncpa [#allocation3], 0
    // Predicated region
    $region2: #{tpu_custom_call.1} parent=1 // pred_check
      _
    $region3: #{tpu_custom_call.1} parent=1 // pred_check_branch
      %14 = sbr.rel (0) target = $region5
    $region4: #{tpu_custom_call.1} parent=1 // pred_region
      %s16 = ssub.s32 128, 128
      %17 = vsyncadd [#allocation3], %s16
      %s19 = sshll.u32 [#allocation2], 4
      %s20 = int_to_ptr.vmem [resolvable:$true] %s19
      %22 = dma.hbm_to_vmem [thread:$0]  %s0, 128, %s20, [#allocation3]
    $region5: #{tpu_custom_call.1} parent=1 // pred_fallthru
      _
    // Predicated region
    $region6: #{tpu_custom_call.1} parent=1 // pred_check
      _
    $region7: #{tpu_custom_call.1} parent=1 // pred_check_branch
      %24 = sbr.rel (0) target = $region9
    $region8: #{tpu_custom_call.1} parent=1 // pred_region
      _
    $region9: #{tpu_custom_call.1} parent=1 // pred_fallthru
      _
    // Predicated region
    $region10: #{tpu_custom_call.1} parent=1 // pred_check
      _
    $region11: #{tpu_custom_call.1} parent=1 // pred_check_branch
      %26 = sbr.rel (0) target = $region13
    $region12: #{tpu_custom_call.1} parent=1 // pred_region
      _
    $region13: #{tpu_custom_call.1} parent=1 // pred_fallthru
      _
    // Predicated region
    $region14: #{tpu_custom_call.1} parent=1 // pred_check
      _
    $region15: #{tpu_custom_call.1} parent=1 // pred_check_branch
      %28 = sbr.rel (0) target = $region17
    $region16: #{tpu_custom_call.1} parent=1 // pred_region
      _
    $region17: #{tpu_custom_call.1} parent=1 // pred_fallthru
      _
    // Predicated region
    $region18: #{tpu_custom_call.1} parent=1 // pred_check
      _
    $region19: #{tpu_custom_call.1} parent=1 // pred_check_branch
      %30 = sbr.rel (0) target = $region21
    $region20: #{tpu_custom_call.1} parent=1 // pred_region
      _
    $region21: #{tpu_custom_call.1} parent=1 // pred_fallthru
      _
    // Predicated region
    $region22: #{tpu_custom_call.1} parent=1 // pred_check
      _
    $region23: #{tpu_custom_call.1} parent=1 // pred_check_branch
      %32 = sbr.rel (0) target = $region25
    $region24: #{tpu_custom_call.1} parent=1 // pred_region
      _
    $region25: #{tpu_custom_call.1} parent=1 // pred_fallthru
      _
    // Predicated region
    $region26: #{tpu_custom_call.1} parent=1 // pred_check
      _
    $region27: #{tpu_custom_call.1} parent=1 // pred_check_branch
      %34 = sbr.rel (0) target = $region29
    $region28: #{tpu_custom_call.1} parent=1 // pred_region
      _
    $region29: #{tpu_custom_call.1} parent=1 // pred_fallthru
      _
    // Predicated region
    $region30: #{tpu_custom_call.1} parent=1 // pred_check
      _
    $region31: #{tpu_custom_call.1} parent=1 // pred_check_branch
      %36 = sbr.rel (0) target = $region33
    $region32: #{tpu_custom_call.1} parent=1 // pred_region
      %37 = dma.done [#allocation3], 128
    $region33: #{tpu_custom_call.1} parent=1 // pred_fallthru
      _
    %v39 = vld [vmem:[#allocation2] sm:$0xff]
    %v40 = vpack.c.bf16 %v39, %v39
    %v41 = vld [vmem:[%s1] sm:$0xf]
    %v42 = vld [vmem:[%s2] sm:$0x1]
    %v44 = vlaneseq
    %v45 = vshrl.u32 %v44, 7
    %v46 = vsub.s32 0, %v45
    %v47 = vrot.slane %v42, %v46
    %vm49 = vcmask 64512
    %v51 = vsel %vm49, %v40, 0
    %vm53 = vcmask 1043456
    %v55 = vsel %vm53, %v41, 0
    %57 = vmatprep.subr.bf16.mxu0 0
    %58 = vmatpush1.bf16.msra.mxu0 0
    %59 = vmatprep.subr.bf16.mxu0 0
    %60 = vmatpush1.bf16.msra.mxu0 0
    %61 = vmatprep.subr.bf16.mxu0 0
    %62 = vmatpush1.bf16.msra.mxu0 0
    %63 = vmatprep.subr.bf16.mxu0 0
    %64 = vmatpush1.bf16.msra.mxu0 0
    %65 = vmatprep.subr.bf16.mxu0 0
    %66 = vmatpush1.bf16.msra.mxu0 0
    %67 = vmatprep.subr.bf16.mxu0 0
    %68 = vmatpush1.bf16.msra.mxu0 0
    %69 = vmatprep.subr.bf16.mxu0 0
    %70 = vmatpush1.bf16.msra.mxu0 0
    %71 = vmatprep.subr.bf16.mxu0 0
    %72 = vmatpush1.bf16.msra.mxu0 %v55
    %73 = vmatprep.subr.bf16.mxu0 0
    %74 = vmatpush2.bf16.msra.mxu0 0
    %75 = vmatprep.subr.bf16.mxu0 0
    %76 = vmatpush2.bf16.msra.mxu0 0
    %77 = vmatprep.subr.bf16.mxu0 0
    %78 = vmatpush2.bf16.msra.mxu0 0
    %79 = vmatprep.subr.bf16.mxu0 0
    %80 = vmatpush2.bf16.msra.mxu0 0
    %81 = vmatprep.subr.bf16.mxu0 0
    %82 = vmatpush2.bf16.msra.mxu0 0
    %83 = vmatprep.subr.bf16.mxu0 0
    %84 = vmatpush2.bf16.msra.mxu0 0
    %85 = vmatprep.subr.bf16.mxu0 0
    %86 = vmatpush2.bf16.msra.mxu0 0
    %87 = vmatprep.subr.bf16.mxu0 0
    %88 = vmatpush2.bf16.msra.mxu0 0
    %89 = vmatprep.mubr.bf16.mxu0 0
    %90 = vmatmul.mubr.bf16.gmra.mxu0 %v51
    %v91 = vpop.f32.mrf.mxu0
    %v92 = vadd.f32 %v47, %v91
    %v93 = vpop.f32.mrf.mxu0
    %v94 = vpop.f32.mrf.mxu0
    %v95 = vpop.f32.mrf.mxu0
    %96 = vdwg.mxu0
    %v97 = vmax.f32 %v92, 0.0
    %v98 = vpack.c.bf16 %v97, %v97
    %v99 = vld [vmem:[%s3] sm:$0xf]
    %v100 = vld [vmem:[%s3 + $0x4] sm:$0xf]
    %v101 = vld [vmem:[%s3 + $0x8] sm:$0xf]
    %v102 = vld [vmem:[%s3 + $0xc] sm:$0xf]
    %v103 = vld [vmem:[%s3 + $0x10] sm:$0xf]
    %v104 = vld [vmem:[%s3 + $0x14] sm:$0xf]
    %v105 = vld [vmem:[%s3 + $0x18] sm:$0xf]
    %v106 = vld [vmem:[%s3 + $0x1c] sm:$0xf]
    %v107 = vld [vmem:[%s3 + $0x20] sm:$0xf]
    %v108 = vld [vmem:[%s3 + $0x24] sm:$0xf]
    %v109 = vld [vmem:[%s3 + $0x28] sm:$0xf]
    %v110 = vld [vmem:[%s3 + $0x2c] sm:$0xf]
    %v111 = vld [vmem:[%s3 + $0x30] sm:$0xf]
    %v112 = vld [vmem:[%s3 + $0x34] sm:$0xf]
    %v113 = vld [vmem:[%s3 + $0x38] sm:$0xf]
    %v114 = vld [vmem:[%s3 + $0x3c] sm:$0xf]
    %v115 = vld [vmem:[%s4] sm:$0x1]
    %v117 = vlaneseq
    %v118 = vshrl.u32 %v117, 7
    %v119 = vsub.s32 0, %v118
    %v120 = vrot.slane %v115, %v119
    %v138 = vunpack.c.l.b16 %v99
    %v139 = vunpack.c.l.b16 %v100
    %v140 = vunpack.c.l.b16 %v101
    %v141 = vunpack.c.l.b16 %v102
    %v142 = vunpack.c.l.b16 %v103
    %v143 = vunpack.c.l.b16 %v104
    %v144 = vunpack.c.l.b16 %v105
    %v145 = vunpack.c.l.b16 %v106
    %v146 = vunpack.c.l.b16 %v107
    %v147 = vunpack.c.l.b16 %v108
    %v148 = vunpack.c.l.b16 %v109
    %v149 = vunpack.c.l.b16 %v110
    %v150 = vunpack.c.l.b16 %v111
    %v151 = vunpack.c.l.b16 %v112
    %v152 = vunpack.c.l.b16 %v113
    %v153 = vunpack.c.l.b16 %v114
    %v154 = vpack.c.b16 %v139, %v138
    %v155 = vpack.c.b16 %v141, %v140
    %v156 = vpack.c.b16 %v143, %v142
    %v157 = vpack.c.b16 %v145, %v144
    %v158 = vpack.c.b16 %v147, %v146
    %v159 = vpack.c.b16 %v149, %v148
    %v160 = vpack.c.b16 %v151, %v150
    %v161 = vpack.c.b16 %v153, %v152
    %170 = vmatprep.subr.bf16.mxu0 0
    %171 = vmatpush1.bf16.msra.mxu0 %v161
    %172 = vmatprep.subr.bf16.mxu0 0
    %173 = vmatpush1.bf16.msra.mxu0 %v160
    %174 = vmatprep.subr.bf16.mxu0 0
    %175 = vmatpush1.bf16.msra.mxu0 %v159
    %176 = vmatprep.subr.bf16.mxu0 0
    %177 = vmatpush1.bf16.msra.mxu0 %v158
    %178 = vmatprep.subr.bf16.mxu0 0
    %179 = vmatpush1.bf16.msra.mxu0 %v157
    %180 = vmatprep.subr.bf16.mxu0 0
    %181 = vmatpush1.bf16.msra.mxu0 %v156
    %182 = vmatprep.subr.bf16.mxu0 0
    %183 = vmatpush1.bf16.msra.mxu0 %v155
    %184 = vmatprep.subr.bf16.mxu0 0
    %185 = vmatpush1.bf16.msra.mxu0 %v154
    %186 = vmatprep.subr.bf16.mxu0 0
    %187 = vmatpush2.bf16.msra.mxu0 0
    %188 = vmatprep.subr.bf16.mxu0 0
    %189 = vmatpush2.bf16.msra.mxu0 0
    %190 = vmatprep.subr.bf16.mxu0 0
    %191 = vmatpush2.bf16.msra.mxu0 0
    %192 = vmatprep.subr.bf16.mxu0 0
    %193 = vmatpush2.bf16.msra.mxu0 0
    %194 = vmatprep.subr.bf16.mxu0 0
    %195 = vmatpush2.bf16.msra.mxu0 0
    %196 = vmatprep.subr.bf16.mxu0 0
    %197 = vmatpush2.bf16.msra.mxu0 0
    %198 = vmatprep.subr.bf16.mxu0 0
    %199 = vmatpush2.bf16.msra.mxu0 0
    %200 = vmatprep.subr.bf16.mxu0 0
    %201 = vmatpush2.bf16.msra.mxu0 0
    %202 = vmatprep.mubr.bf16.mxu0 0
    %203 = vmatmul.mubr.bf16.gmra.mxu0 %v98
    %v204 = vpop.f32.mrf.mxu0
    %v205 = vadd.f32 %v120, %v204
    %v206 = vpop.f32.mrf.mxu0
    %v207 = vpop.f32.mrf.mxu0
    %v208 = vpop.f32.mrf.mxu0
    %209 = vdwg.mxu0
    %v210 = vmax.f32 %v205, 0.0
    %v211 = vpack.c.bf16 %v210, %v210
    %v212 = vld [vmem:[%s5] sm:$0xf]
    %v213 = vld [vmem:[%s5 + $0x4] sm:$0xf]
    %v214 = vld [vmem:[%s5 + $0x8] sm:$0xf]
    %v215 = vld [vmem:[%s5 + $0xc] sm:$0xf]
    %v216 = vld [vmem:[%s5 + $0x10] sm:$0xf]
    %v217 = vld [vmem:[%s5 + $0x14] sm:$0xf]
    %v218 = vld [vmem:[%s5 + $0x18] sm:$0xf]
    %v219 = vld [vmem:[%s5 + $0x1c] sm:$0xf]
    %v220 = vld [vmem:[%s5 + $0x20] sm:$0xf]
    %v221 = vld [vmem:[%s5 + $0x24] sm:$0xf]
    %v222 = vld [vmem:[%s5 + $0x28] sm:$0xf]
    %v223 = vld [vmem:[%s5 + $0x2c] sm:$0xf]
    %v224 = vld [vmem:[%s5 + $0x30] sm:$0xf]
    %v225 = vld [vmem:[%s5 + $0x34] sm:$0xf]
    %v226 = vld [vmem:[%s5 + $0x38] sm:$0xf]
    %v227 = vld [vmem:[%s5 + $0x3c] sm:$0xf]
    %v228 = vld [vmem:[%s6] sm:$0x1]
    %v230 = vlaneseq
    %v231 = vshrl.u32 %v230, 7
    %v232 = vsub.s32 0, %v231
    %v233 = vrot.slane %v228, %v232
    %v251 = vunpack.c.l.b16 %v212
    %v252 = vunpack.c.l.b16 %v213
    %v253 = vunpack.c.l.b16 %v214
    %v254 = vunpack.c.l.b16 %v215
    %v255 = vunpack.c.l.b16 %v216
    %v256 = vunpack.c.l.b16 %v217
    %v257 = vunpack.c.l.b16 %v218
    %v258 = vunpack.c.l.b16 %v219
    %v259 = vunpack.c.l.b16 %v220
    %v260 = vunpack.c.l.b16 %v221
    %v261 = vunpack.c.l.b16 %v222
    %v262 = vunpack.c.l.b16 %v223
    %v263 = vunpack.c.l.b16 %v224
    %v264 = vunpack.c.l.b16 %v225
    %v265 = vunpack.c.l.b16 %v226
    %v266 = vunpack.c.l.b16 %v227
    %v267 = vpack.c.b16 %v252, %v251
    %v268 = vpack.c.b16 %v254, %v253
    %v269 = vpack.c.b16 %v256, %v255
    %v270 = vpack.c.b16 %v258, %v257
    %v271 = vpack.c.b16 %v260, %v259
    %v272 = vpack.c.b16 %v262, %v261
    %v273 = vpack.c.b16 %v264, %v263
    %v274 = vpack.c.b16 %v266, %v265
    %283 = vmatprep.subr.bf16.mxu0 0
    %284 = vmatpush1.bf16.msra.mxu0 %v274
    %285 = vmatprep.subr.bf16.mxu0 0
    %286 = vmatpush1.bf16.msra.mxu0 %v273
    %287 = vmatprep.subr.bf16.mxu0 0
    %288 = vmatpush1.bf16.msra.mxu0 %v272
    %289 = vmatprep.subr.bf16.mxu0 0
    %290 = vmatpush1.bf16.msra.mxu0 %v271
    %291 = vmatprep.subr.bf16.mxu0 0
    %292 = vmatpush1.bf16.msra.mxu0 %v270
    %293 = vmatprep.subr.bf16.mxu0 0
    %294 = vmatpush1.bf16.msra.mxu0 %v269
    %295 = vmatprep.subr.bf16.mxu0 0
    %296 = vmatpush1.bf16.msra.mxu0 %v268
    %297 = vmatprep.subr.bf16.mxu0 0
    %298 = vmatpush1.bf16.msra.mxu0 %v267
    %299 = vmatprep.subr.bf16.mxu0 0
    %300 = vmatpush2.bf16.msra.mxu0 0
    %301 = vmatprep.subr.bf16.mxu0 0
    %302 = vmatpush2.bf16.msra.mxu0 0
    %303 = vmatprep.subr.bf16.mxu0 0
    %304 = vmatpush2.bf16.msra.mxu0 0
    %305 = vmatprep.subr.bf16.mxu0 0
    %306 = vmatpush2.bf16.msra.mxu0 0
    %307 = vmatprep.subr.bf16.mxu0 0
    %308 = vmatpush2.bf16.msra.mxu0 0
    %309 = vmatprep.subr.bf16.mxu0 0
    %310 = vmatpush2.bf16.msra.mxu0 0
    %311 = vmatprep.subr.bf16.mxu0 0
    %312 = vmatpush2.bf16.msra.mxu0 0
    %313 = vmatprep.subr.bf16.mxu0 0
    %314 = vmatpush2.bf16.msra.mxu0 0
    %315 = vmatprep.mubr.bf16.mxu0 0
    %316 = vmatmul.mubr.bf16.gmra.mxu0 %v211
    %v317 = vpop.f32.mrf.mxu0
    %v318 = vadd.f32 %v233, %v317
    %v319 = vpop.f32.mrf.mxu0
    %v320 = vpop.f32.mrf.mxu0
    %v321 = vpop.f32.mrf.mxu0
    %322 = vdwg.mxu0
    %vm323 = vcmask 31744
    %324 = vst.msk [vmem:[%s7] sm:$0xff] %vm323, %v318
    // Predicated region
    $region34: #{tpu_custom_call.1} parent=1 // pred_check
      _
    $region35: #{tpu_custom_call.1} parent=1 // pred_check_branch
      %326 = sbr.rel (0) target = $region37
    $region36: #{tpu_custom_call.1} parent=1 // pred_region
      _
    $region37: #{tpu_custom_call.1} parent=1 // pred_fallthru
      _
    // Predicated region
    $region38: #{tpu_custom_call.1} parent=1 // pred_check
      _
    $region39: #{tpu_custom_call.1} parent=1 // pred_check_branch
      %328 = sbr.rel (0) target = $region41
    $region40: #{tpu_custom_call.1} parent=1 // pred_region
      _
    $region41: #{tpu_custom_call.1} parent=1 // pred_fallthru
      _
    %329 = vsyncpa [#allocation3], 1

</llo_original>
